<compile_context>
chip_gen: v6e
topology: v6e:2x2x1
jax: 0.10.0
libtpu: 0.0.40
codegen_flags: <defaults>
</compile_context>

<pallas_src>
import functools

import jax
import jax.numpy as jnp
from jax.experimental import pallas as pl
from jax.experimental.pallas import tpu as pltpu


def _round_up(n, m):
    return ((n + m - 1) // m) * m


_MIN_GRID_STEPS = 4   # >= 2 per TensorCore on v7x (2 TCs) + enables DMA/compute overlap
_BATCH_ALIGN = 16     # bf16 packs 16 rows per sublane group


def _leaky_relu(v, slope=0.01):
    # torch.nn.LeakyReLU() default negative_slope = 0.01.
    # max(v, slope*v) == where(v > 0, v, slope*v) for slope in (0, 1); mul+max
    # is cheaper on the VPU than cmp+select.
    return jnp.maximum(v, slope * v)


def _h_disc_kernel(x_ref, w1_ref, b1_ref, w2_ref, b2_ref, w3_ref, b3_ref, o_ref):
    """One batch tile: three fused (matmul + bias + LeakyReLU) stages.

    x arrives as f32 (half the input HBM bytes vs. a wrapper-side bf16 cast);
    the cast to the MXU streaming dtype happens here on the VPU. Accumulation
    and all elementwise math are f32.
    """
    x = x_ref[...].astype(w1_ref.dtype)

    h = jnp.dot(x, w1_ref[...], preferred_element_type=jnp.float32) + b1_ref[...]
    h = _leaky_relu(h)

    h = jnp.dot(h.astype(w2_ref.dtype), w2_ref[...],
                preferred_element_type=jnp.float32) + b2_ref[...]
    h = _leaky_relu(h)

    out = jnp.dot(h.astype(w3_ref.dtype), w3_ref[...],
                  preferred_element_type=jnp.float32) + b3_ref[...]
    out = _leaky_relu(out)

    o_ref[...] = out.astype(o_ref.dtype)


def _pick_batch_tile(batch, block_batch):
    """Pick (tile, padded_batch) aiming for >= _MIN_GRID_STEPS grid steps."""
    padded = _round_up(max(batch, _BATCH_ALIGN), _BATCH_ALIGN)
    target = _round_up(pl.cdiv(padded, _MIN_GRID_STEPS), _BATCH_ALIGN)
    tb = max(_BATCH_ALIGN, min(block_batch, target))
    padded = _round_up(batch, tb)
    return tb, padded


@functools.partial(jax.jit, static_argnames=("block_batch", "compute_dtype"))
def h_discriminator_forward(x, params, *, block_batch=2048,
                            compute_dtype=jnp.bfloat16):
    """Fused forward pass of H_Discriminator.

    x:      (batch, input_size) float32
    params: dict with w1 (in,h), b1 (1,h), w2 (h,h), b2 (1,h),
                      w3 (h,out), b3 (1,out)   — all float32
    returns (batch, output_size) float32
    """
    w1, b1 = params["w1"], params["b1"]
    w2, b2 = params["w2"], params["b2"]
    w3, b3 = params["w3"], params["b3"]

    batch, in_size = x.shape
    out_size = w3.shape[1]

    # Weights stream in compute_dtype (bf16 default: MXU-native, halves resident
    # weight bytes); biases stay f32 to keep the bias-add exact.
    w1c = w1.astype(compute_dtype)
    w2c = w2.astype(compute_dtype)
    w3c = w3.astype(compute_dtype)
    b1f = b1.astype(jnp.float32)
    b2f = b2.astype(jnp.float32)
    b3f = b3.astype(jnp.float32)

    # --- batch tiling: >= _MIN_GRID_STEPS steps when possible, 16-row aligned --
    tb, padded_batch = _pick_batch_tile(batch, block_batch)
    if padded_batch != batch:
        # Zero rows flow through bias+LeakyReLU and are sliced off below.
        x = jnp.pad(x, ((0, padded_batch - batch), (0, 0)))
    grid = (padded_batch // tb,)

    # Weights/biases: constant index_map => DMA'd once, VMEM-resident across the
    # grid while x/out blocks are double-buffered and pipelined against compute.
    const = lambda a: pl.BlockSpec(a.shape, lambda i: (0, 0))

    out = pl.pallas_call(
        _h_disc_kernel,
        out_shape=jax.ShapeDtypeStruct((padded_batch, out_size), jnp.float32),
        grid=grid,
        in_specs=[
            pl.BlockSpec((tb, in_size), lambda i: (i, 0)),  # x: tiled over batch
            const(w1c), const(b1f),
            const(w2c), const(b2f),
            const(w3c), const(b3f),
        ],
        # Unpadded (tb, out_size) output block: last dim equals the full array
        # dim (legal per the (8,128) rule) and avoids 128-lane zero padding.
        out_specs=pl.BlockSpec((tb, out_size), lambda i: (i, 0)),
        compiler_params=pltpu.CompilerParams(
            dimension_semantics=("parallel",),  # megacore sharding on v7x
        ),
    )(x, w1c, b1f, w2c, b2f, w3c, b3f)

    if padded_batch != batch:
        out = out[:batch]
    return out


def init_params(key, input_size, hidden_size, output_size):
    """Deterministic init mimicking nn.Linear's uniform(-1/sqrt(fan_in), +)."""
    ks = jax.random.split(key, 6)

    def linear(kw, kb, fan_in, fan_out):
        bound = 1.0 / jnp.sqrt(jnp.float32(fan_in))
        # stored as (in, out): transpose of torch's (out, in) weight
        w = jax.random.uniform(kw, (fan_in, fan_out), jnp.float32, -bound, bound)
        b = jax.random.uniform(kb, (1, fan_out), jnp.float32, -bound, bound)
        return w, b

    w1, b1 = linear(ks[0], ks[1], input_size, hidden_size)
    w2, b2 = linear(ks[2], ks[3], hidden_size, hidden_size)
    w3, b3 = linear(ks[4], ks[5], hidden_size, output_size)
    return {"w1": w1, "b1": b1, "w2": w2, "b2": b2, "w3": w3, "b3": b3}


def reference_forward(x, p):
    """Pure-JAX f32 reference with the exact torch semantics (LeakyReLU after
    every Linear, including the last — as written in H_Discriminator.forward)."""
    lrelu = lambda v: jnp.where(v > 0, v, 0.01 * v)
    h = lrelu(x @ p["w1"] + p["b1"])
    h = lrelu(h @ p["w2"] + p["b2"])
    return lrelu(h @ p["w3"] + p["b3"])


if __name__ == "__main__":
    input_size, hidden_size, output_size = 64, 32, 16
    batch = 8

    key = jax.random.PRNGKey(0)
    kx, kp = jax.random.split(key)
    x = jax.random.normal(kx, (batch, input_size), jnp.float32)
    params = init_params(kp, input_size, hidden_size, output_size)

    ref = reference_forward(x, params)

    # f32 path: tight correctness check against the reference.
    out_f32 = jax.block_until_ready(
        h_discriminator_forward(x, params, compute_dtype=jnp.float32))
    assert out_f32.shape == (batch, output_size)
    assert jnp.allclose(out_f32, ref, atol=1e-4, rtol=1e-4), "f32 mismatch vs reference"

    # bf16-streamed path (the perf default): looser tolerance for the cast.
    out_bf16 = jax.block_until_ready(
        h_discriminator_forward(x, params, compute_dtype=jnp.bfloat16))
    assert out_bf16.shape == (batch, output_size)
    assert jnp.allclose(out_bf16, ref, atol=5e-2, rtol=5e-2), "bf16 mismatch vs reference"

    # Larger batch: exercises the multi-step grid (pipelined / megacore path)
    # and the batch-padding + slice-back path.
    xb = jax.random.normal(kx, (100, input_size), jnp.float32)
    refb = reference_forward(xb, params)
    outb = jax.block_until_ready(
        h_discriminator_forward(xb, params, compute_dtype=jnp.float32))
    assert outb.shape == (100, output_size)
    assert jnp.allclose(outb, refb, atol=1e-4, rtol=1e-4), "multi-tile mismatch"

    print("KERNEL_OK")
</pallas_src>

<mosaic_0001>
module attributes {stable_mosaic.version = 11 : i64} {
  func.func @_h_disc_kernel(%arg0: i32, %arg1: memref<16x64xf32, #tpu.memory_space<vmem>>, %arg2: memref<64x32xf32, #tpu.memory_space<vmem>>, %arg3: memref<1x32xf32, #tpu.memory_space<vmem>>, %arg4: memref<32x32xf32, #tpu.memory_space<vmem>>, %arg5: memref<1x32xf32, #tpu.memory_space<vmem>>, %arg6: memref<32x16xf32, #tpu.memory_space<vmem>>, %arg7: memref<1x16xf32, #tpu.memory_space<vmem>>, %arg8: memref<16x16xf32, #tpu.memory_space<vmem>>) attributes {dimension_semantics = [#tpu.dimension_semantics<parallel>], iteration_bounds = array<i64: 1>, scalar_prefetch = 0 : i64, scratch_operands = 0 : i64, tpu.core_type = #tpu.core_type<tc>, window_params = [{transform_indices = @transform_0, window_bounds = array<i64: 16, 64>}, {pipeline_mode = #tpu.pipeline_mode<synchronous>, transform_indices = @transform_1, window_bounds = array<i64: 64, 32>}, {pipeline_mode = #tpu.pipeline_mode<synchronous>, transform_indices = @transform_2, window_bounds = array<i64: 1, 32>}, {pipeline_mode = #tpu.pipeline_mode<synchronous>, transform_indices = @transform_3, window_bounds = array<i64: 32, 32>}, {pipeline_mode = #tpu.pipeline_mode<synchronous>, transform_indices = @transform_4, window_bounds = array<i64: 1, 32>}, {pipeline_mode = #tpu.pipeline_mode<synchronous>, transform_indices = @transform_5, window_bounds = array<i64: 32, 16>}, {pipeline_mode = #tpu.pipeline_mode<synchronous>, transform_indices = @transform_6, window_bounds = array<i64: 1, 16>}, {transform_indices = @transform_7, window_bounds = array<i64: 16, 16>}]} {
    %c0 = arith.constant 0 : index
    %c0_0 = arith.constant 0 : index
    %0 = vector.load %arg1[%c0, %c0_0] : memref<16x64xf32, #tpu.memory_space<vmem>>, vector<16x64xf32>
    %c0_1 = arith.constant 0 : index
    %c0_2 = arith.constant 0 : index
    %1 = vector.load %arg2[%c0_1, %c0_2] : memref<64x32xf32, #tpu.memory_space<vmem>>, vector<64x32xf32>
    %cst = arith.constant dense<0.000000e+00> : vector<16x32xf32>
    %2 = tpu.matmul %0, %1, %cst {dimension_numbers = #tpu.dot_dimension_numbers<[1], [0], [0], [1], [0, 0, 1, 1], [], []>} : vector<16x64xf32>, vector<64x32xf32>, vector<16x32xf32> -> vector<16x32xf32>
    %c0_3 = arith.constant 0 : index
    %c0_4 = arith.constant 0 : index
    %3 = vector.load %arg3[%c0_3, %c0_4] : memref<1x32xf32, #tpu.memory_space<vmem>>, vector<1x32xf32>
    %4 = vector.broadcast %3 : vector<1x32xf32> to vector<16x32xf32>
    %5 = arith.addf %2, %4 : vector<16x32xf32>
    %cst_5 = arith.constant 0.00999999977 : f32
    %6 = vector.broadcast %cst_5 : f32 to vector<16x32xf32>
    %7 = arith.mulf %6, %5 : vector<16x32xf32>
    %8 = arith.maximumf %5, %7 : vector<16x32xf32>
    %c0_6 = arith.constant 0 : index
    %c0_7 = arith.constant 0 : index
    %9 = vector.load %arg4[%c0_6, %c0_7] : memref<32x32xf32, #tpu.memory_space<vmem>>, vector<32x32xf32>
    %cst_8 = arith.constant dense<0.000000e+00> : vector<16x32xf32>
    %10 = tpu.matmul %8, %9, %cst_8 {dimension_numbers = #tpu.dot_dimension_numbers<[1], [0], [0], [1], [0, 0, 1, 1], [], []>} : vector<16x32xf32>, vector<32x32xf32>, vector<16x32xf32> -> vector<16x32xf32>
    %c0_9 = arith.constant 0 : index
    %c0_10 = arith.constant 0 : index
    %11 = vector.load %arg5[%c0_9, %c0_10] : memref<1x32xf32, #tpu.memory_space<vmem>>, vector<1x32xf32>
    %12 = vector.broadcast %11 : vector<1x32xf32> to vector<16x32xf32>
    %13 = arith.addf %10, %12 : vector<16x32xf32>
    %cst_11 = arith.constant 0.00999999977 : f32
    %14 = vector.broadcast %cst_11 : f32 to vector<16x32xf32>
    %15 = arith.mulf %14, %13 : vector<16x32xf32>
    %16 = arith.maximumf %13, %15 : vector<16x32xf32>
    %c0_12 = arith.constant 0 : index
    %c0_13 = arith.constant 0 : index
    %17 = vector.load %arg6[%c0_12, %c0_13] : memref<32x16xf32, #tpu.memory_space<vmem>>, vector<32x16xf32>
    %cst_14 = arith.constant dense<0.000000e+00> : vector<16x16xf32>
    %18 = tpu.matmul %16, %17, %cst_14 {dimension_numbers = #tpu.dot_dimension_numbers<[1], [0], [0], [1], [0, 0, 1, 1], [], []>} : vector<16x32xf32>, vector<32x16xf32>, vector<16x16xf32> -> vector<16x16xf32>
    %c0_15 = arith.constant 0 : index
    %c0_16 = arith.constant 0 : index
    %19 = vector.load %arg7[%c0_15, %c0_16] : memref<1x16xf32, #tpu.memory_space<vmem>>, vector<1x16xf32>
    %20 = vector.broadcast %19 : vector<1x16xf32> to vector<16x16xf32>
    %21 = arith.addf %18, %20 : vector<16x16xf32>
    %cst_17 = arith.constant 0.00999999977 : f32
    %22 = vector.broadcast %cst_17 : f32 to vector<16x16xf32>
    %23 = arith.mulf %22, %21 : vector<16x16xf32>
    %24 = arith.maximumf %21, %23 : vector<16x16xf32>
    %c0_18 = arith.constant 0 : index
    %c0_19 = arith.constant 0 : index
    %25 = vector.load %arg8[%c0_18, %c0_19] : memref<16x16xf32, #tpu.memory_space<vmem>>, vector<16x16xf32>
    tpu.vector_store %arg8[%c0_18, %c0_19], %24 {strides = array<i32>} : memref<16x16xf32, #tpu.memory_space<vmem>>, vector<16x16xf32>,
    return
  }
  func.func @transform_0(%arg0: i32) -> (i32, i32) {
    %c0_i32 = arith.constant 0 : i32
    %c0_i32_0 = arith.constant 0 : i32
    return %arg0, %c0_i32 : i32, i32
  }
  func.func @transform_1(%arg0: i32) -> (i32, i32) {
    %c0_i32 = arith.constant 0 : i32
    %c0_i32_0 = arith.constant 0 : i32
    %c0_i32_1 = arith.constant 0 : i32
    return %c0_i32, %c0_i32_0 : i32, i32
  }
  func.func @transform_2(%arg0: i32) -> (i32, i32) {
    %c0_i32 = arith.constant 0 : i32
    %c0_i32_0 = arith.constant 0 : i32
    %c0_i32_1 = arith.constant 0 : i32
    return %c0_i32, %c0_i32_0 : i32, i32
  }
  func.func @transform_3(%arg0: i32) -> (i32, i32) {
    %c0_i32 = arith.constant 0 : i32
    %c0_i32_0 = arith.constant 0 : i32
    %c0_i32_1 = arith.constant 0 : i32
    return %c0_i32, %c0_i32_0 : i32, i32
  }
  func.func @transform_4(%arg0: i32) -> (i32, i32) {
    %c0_i32 = arith.constant 0 : i32
    %c0_i32_0 = arith.constant 0 : i32
    %c0_i32_1 = arith.constant 0 : i32
    return %c0_i32, %c0_i32_0 : i32, i32
  }
  func.func @transform_5(%arg0: i32) -> (i32, i32) {
    %c0_i32 = arith.constant 0 : i32
    %c0_i32_0 = arith.constant 0 : i32
    %c0_i32_1 = arith.constant 0 : i32
    return %c0_i32, %c0_i32_0 : i32, i32
  }
  func.func @transform_6(%arg0: i32) -> (i32, i32) {
    %c0_i32 = arith.constant 0 : i32
    %c0_i32_0 = arith.constant 0 : i32
    %c0_i32_1 = arith.constant 0 : i32
    return %c0_i32, %c0_i32_0 : i32, i32
  }
  func.func @transform_7(%arg0: i32) -> (i32, i32) {
    %c0_i32 = arith.constant 0 : i32
    %c0_i32_0 = arith.constant 0 : i32
    return %arg0, %c0_i32 : i32, i32
  }
}

</mosaic_0001>

<llo_original>
// kernel: h_discriminator_forward.1
$region0: #{h_discriminator_forward.1}
  #allocation0 [shape = 'u32[]', space=smem, size = 0x4, offset = 0x4, fixed_abs, tag = 'smem constant byte address 0x4 - core index']
  #allocation1 [shape = 'u32[144,128]{1,0:T(1,128)}', space=vmem, size = 0x12000, scoped, tag = 'internal scratch']
  %s0 = inlined_call_operand.vmem [shape: f32[16,64], index: 0, kind: input, shape index: {}]
  %s1 = inlined_call_operand.vmem [shape: f32[64,32], index: 1, kind: input, shape index: {}]
  %s2 = inlined_call_operand.vmem [shape: f32[1,32], index: 2, kind: input, shape index: {}]
  %s3 = inlined_call_operand.vmem [shape: f32[32,32], index: 3, kind: input, shape index: {}]
  %s4 = inlined_call_operand.vmem [shape: f32[1,32], index: 4, kind: input, shape index: {}]
  %s5 = inlined_call_operand.vmem [shape: f32[32,16], index: 5, kind: input, shape index: {}]
  %s6 = inlined_call_operand.vmem [shape: f32[1,16], index: 6, kind: input, shape index: {}]
  %s7 = inlined_call_operand.vmem [shape: f32[16,16], index: 7, kind: output, shape index: {}]
  %s8 = sld [smem:[#allocation0]]
  $region38: #{h_discriminator_forward.1} parent=0
    _
  %s10 = ssub.s32 1, %s8
  %s11 = scalar_select 0, %s10, %s8
  // Predicated region
  $region2: #{h_discriminator_forward.1} parent=0 // pred_check
    _
  $region3: #{h_discriminator_forward.1} parent=0 // pred_check_branch
    %13 = sbr.rel (0) target = $region5
  $region4: #{h_discriminator_forward.1} parent=0 // pred_region
    _
  $region5: #{h_discriminator_forward.1} parent=0 // pred_fallthru
    _
  // Predicated region
  $region6: #{h_discriminator_forward.1} parent=0 // pred_check
    _
  $region7: #{h_discriminator_forward.1} parent=0 // pred_check_branch
    %15 = sbr.rel (0) target = $region9
  $region8: #{h_discriminator_forward.1} parent=0 // pred_region
    _
  $region9: #{h_discriminator_forward.1} parent=0 // pred_fallthru
    _
  // Predicated region
  $region10: #{h_discriminator_forward.1} parent=0 // pred_check
    _
  $region11: #{h_discriminator_forward.1} parent=0 // pred_check_branch
    %17 = sbr.rel (0) target = $region13
  $region12: #{h_discriminator_forward.1} parent=0 // pred_region
    _
  $region13: #{h_discriminator_forward.1} parent=0 // pred_fallthru
    _
  // Predicated region
  $region14: #{h_discriminator_forward.1} parent=0 // pred_check
    _
  $region15: #{h_discriminator_forward.1} parent=0 // pred_check_branch
    %19 = sbr.rel (0) target = $region17
  $region16: #{h_discriminator_forward.1} parent=0 // pred_region
    _
  $region17: #{h_discriminator_forward.1} parent=0 // pred_fallthru
    _
  // Predicated region
  $region18: #{h_discriminator_forward.1} parent=0 // pred_check
    _
  $region19: #{h_discriminator_forward.1} parent=0 // pred_check_branch
    %21 = sbr.rel (0) target = $region21
  $region20: #{h_discriminator_forward.1} parent=0 // pred_region
    _
  $region21: #{h_discriminator_forward.1} parent=0 // pred_fallthru
    _
  // Predicated region
  $region22: #{h_discriminator_forward.1} parent=0 // pred_check
    _
  $region23: #{h_discriminator_forward.1} parent=0 // pred_check_branch
    %23 = sbr.rel (0) target = $region25
  $region24: #{h_discriminator_forward.1} parent=0 // pred_region
    _
  $region25: #{h_discriminator_forward.1} parent=0 // pred_fallthru
    _
  // Predicated region
  $region26: #{h_discriminator_forward.1} parent=0 // pred_check
    _
  $region27: #{h_discriminator_forward.1} parent=0 // pred_check_branch
    %25 = sbr.rel (0) target = $region29
  $region28: #{h_discriminator_forward.1} parent=0 // pred_region
    _
  $region29: #{h_discriminator_forward.1} parent=0 // pred_fallthru
    _
  %v26 = vld [vmem:[%s0] sm:$0xff]
  %v27 = vld [vmem:[%s0 + $0x8] sm:$0xff]
  %v28 = vld [vmem:[%s1] sm:$0xff]
  %v29 = vld [vmem:[%s1 + $0x8] sm:$0xff]
  %v30 = vld [vmem:[%s1 + $0x10] sm:$0xff]
  %v31 = vld [vmem:[%s1 + $0x18] sm:$0xff]
  %v32 = vld [vmem:[%s1 + $0x20] sm:$0xff]
  %v33 = vld [vmem:[%s1 + $0x28] sm:$0xff]
  %v34 = vld [vmem:[%s1 + $0x30] sm:$0xff]
  %v35 = vld [vmem:[%s1 + $0x38] sm:$0xff]
  %v36 = vld [vmem:[%s2] sm:$0x1]
  %v38 = vlaneseq
  %v39 = vshrl.u32 %v38, 7
  %v40 = vsub.s32 0, %v39
  %v41 = vrot.slane %v36, %v40
  %vm43 = vcmask 523264
  %v45 = vsel %vm43, %v26, 0
  %v48 = vsel %vm43, %v27, 0
  %50 = vmatprep.subr.mxu0 0.0
  %51 = vmatpush1.msra.mxu0 0.0
  %52 = vmatprep.subr.mxu0 0.0
  %53 = vmatpush1.msra.mxu0 0.0
  %54 = vmatprep.subr.mxu0 0.0
  %55 = vmatpush1.msra.mxu0 0.0
  %56 = vmatprep.subr.mxu0 0.0
  %57 = vmatpush1.msra.mxu0 0.0
  %58 = vmatprep.subr.mxu0 0.0
  %59 = vmatpush1.msra.mxu0 0.0
  %60 = vmatprep.subr.mxu0 0.0
  %61 = vmatpush1.msra.mxu0 0.0
  %62 = vmatprep.subr.mxu0 0.0
  %63 = vmatpush1.msra.mxu0 0.0
  %64 = vmatprep.subr.mxu0 0.0
  %65 = vmatpush1.msra.mxu0 0.0
  %66 = vmatprep.subr.mxu0 0.0
  %67 = vmatpush1.msra.mxu0 %v35
  %68 = vmatprep.subr.mxu0 0.0
  %69 = vmatpush1.msra.mxu0 %v34
  %70 = vmatprep.subr.mxu0 0.0
  %71 = vmatpush1.msra.mxu0 %v33
  %72 = vmatprep.subr.mxu0 0.0
  %73 = vmatpush1.msra.mxu0 %v32
  %74 = vmatprep.subr.mxu0 0.0
  %75 = vmatpush1.msra.mxu0 %v31
  %76 = vmatprep.subr.mxu0 0.0
  %77 = vmatpush1.msra.mxu0 %v30
  %78 = vmatprep.subr.mxu0 0.0
  %79 = vmatpush1.msra.mxu0 %v29
  %80 = vmatprep.subr.mxu0 0.0
  %81 = vmatpush1.msra.mxu0 %v28
  %82 = vmatprep.subr.mxu0 0.0
  %83 = vmatpush2.msra.mxu0 0.0
  %84 = vmatprep.subr.mxu0 0.0
  %85 = vmatpush2.msra.mxu0 0.0
  %86 = vmatprep.subr.mxu0 0.0
  %87 = vmatpush2.msra.mxu0 0.0
  %88 = vmatprep.subr.mxu0 0.0
  %89 = vmatpush2.msra.mxu0 0.0
  %90 = vmatprep.subr.mxu0 0.0
  %91 = vmatpush2.msra.mxu0 0.0
  %92 = vmatprep.subr.mxu0 0.0
  %93 = vmatpush2.msra.mxu0 0.0
  %94 = vmatprep.subr.mxu0 0.0
  %95 = vmatpush2.msra.mxu0 0.0
  %96 = vmatprep.subr.mxu0 0.0
  %97 = vmatpush2.msra.mxu0 0.0
  %98 = vmatprep.subr.mxu0 0.0
  %99 = vmatpush2.msra.mxu0 0.0
  %100 = vmatprep.subr.mxu0 0.0
  %101 = vmatpush2.msra.mxu0 0.0
  %102 = vmatprep.subr.mxu0 0.0
  %103 = vmatpush2.msra.mxu0 0.0
  %104 = vmatprep.subr.mxu0 0.0
  %105 = vmatpush2.msra.mxu0 0.0
  %106 = vmatprep.subr.mxu0 0.0
  %107 = vmatpush2.msra.mxu0 0.0
  %108 = vmatprep.subr.mxu0 0.0
  %109 = vmatpush2.msra.mxu0 0.0
  %110 = vmatprep.subr.mxu0 0.0
  %111 = vmatpush2.msra.mxu0 0.0
  %112 = vmatprep.subr.mxu0 0.0
  %113 = vmatpush2.msra.mxu0 0.0
  %114 = vmatprep.mubr.f32.mxu0 0.0
  %115 = vmatmul.mubr.f32.gmra.mxu0 %v45
  %v116 = vpop.f32.mrf.mxu0
  %v117 = vadd.f32 %v41, %v116
  %v118 = vpop.f32.mrf.mxu0
  %119 = vmatprep.mubr.f32.mxu0 0.0
  %120 = vmatmul.mubr.f32.gmra.mxu0 %v48
  %v121 = vpop.f32.mrf.mxu0
  %v122 = vadd.f32 %v41, %v121
  %v123 = vpop.f32.mrf.mxu0
  %124 = vdwg.mxu0
  %v125 = vmul.f32 %v117, 0.01
  %v126 = vmul.f32 %v122, 0.01
  %v127 = vmax.f32 %v117, %v125
  %v128 = vmax.f32 %v122, %v126
  %v129 = vld [vmem:[%s3] sm:$0xff]
  %v130 = vld [vmem:[%s3 + $0x8] sm:$0xff]
  %v131 = vld [vmem:[%s3 + $0x10] sm:$0xff]
  %v132 = vld [vmem:[%s3 + $0x18] sm:$0xff]
  %v133 = vld [vmem:[%s4] sm:$0x1]
  %v135 = vlaneseq
  %v136 = vshrl.u32 %v135, 7
  %v137 = vsub.s32 0, %v136
  %v138 = vrot.slane %v133, %v137
  %vm140 = vcmask 261120
  %v142 = vsel %vm140, %v127, 0
  %v145 = vsel %vm140, %v128, 0
  %147 = vmatprep.subr.mxu0 0.0
  %148 = vmatpush1.msra.mxu0 0.0
  %149 = vmatprep.subr.mxu0 0.0
  %150 = vmatpush1.msra.mxu0 0.0
  %151 = vmatprep.subr.mxu0 0.0
  %152 = vmatpush1.msra.mxu0 0.0
  %153 = vmatprep.subr.mxu0 0.0
  %154 = vmatpush1.msra.mxu0 0.0
  %155 = vmatprep.subr.mxu0 0.0
  %156 = vmatpush1.msra.mxu0 0.0
  %157 = vmatprep.subr.mxu0 0.0
  %158 = vmatpush1.msra.mxu0 0.0
  %159 = vmatprep.subr.mxu0 0.0
  %160 = vmatpush1.msra.mxu0 0.0
  %161 = vmatprep.subr.mxu0 0.0
  %162 = vmatpush1.msra.mxu0 0.0
  %163 = vmatprep.subr.mxu0 0.0
  %164 = vmatpush1.msra.mxu0 0.0
  %165 = vmatprep.subr.mxu0 0.0
  %166 = vmatpush1.msra.mxu0 0.0
  %167 = vmatprep.subr.mxu0 0.0
  %168 = vmatpush1.msra.mxu0 0.0
  %169 = vmatprep.subr.mxu0 0.0
  %170 = vmatpush1.msra.mxu0 0.0
  %171 = vmatprep.subr.mxu0 0.0
  %172 = vmatpush1.msra.mxu0 %v132
  %173 = vmatprep.subr.mxu0 0.0
  %174 = vmatpush1.msra.mxu0 %v131
  %175 = vmatprep.subr.mxu0 0.0
  %176 = vmatpush1.msra.mxu0 %v130
  %177 = vmatprep.subr.mxu0 0.0
  %178 = vmatpush1.msra.mxu0 %v129
  %179 = vmatprep.subr.mxu0 0.0
  %180 = vmatpush2.msra.mxu0 0.0
  %181 = vmatprep.subr.mxu0 0.0
  %182 = vmatpush2.msra.mxu0 0.0
  %183 = vmatprep.subr.mxu0 0.0
  %184 = vmatpush2.msra.mxu0 0.0
  %185 = vmatprep.subr.mxu0 0.0
  %186 = vmatpush2.msra.mxu0 0.0
  %187 = vmatprep.subr.mxu0 0.0
  %188 = vmatpush2.msra.mxu0 0.0
  %189 = vmatprep.subr.mxu0 0.0
  %190 = vmatpush2.msra.mxu0 0.0
  %191 = vmatprep.subr.mxu0 0.0
  %192 = vmatpush2.msra.mxu0 0.0
  %193 = vmatprep.subr.mxu0 0.0
  %194 = vmatpush2.msra.mxu0 0.0
  %195 = vmatprep.subr.mxu0 0.0
  %196 = vmatpush2.msra.mxu0 0.0
  %197 = vmatprep.subr.mxu0 0.0
  %198 = vmatpush2.msra.mxu0 0.0
  %199 = vmatprep.subr.mxu0 0.0
  %200 = vmatpush2.msra.mxu0 0.0
  %201 = vmatprep.subr.mxu0 0.0
  %202 = vmatpush2.msra.mxu0 0.0
  %203 = vmatprep.subr.mxu0 0.0
  %204 = vmatpush2.msra.mxu0 0.0
  %205 = vmatprep.subr.mxu0 0.0
  %206 = vmatpush2.msra.mxu0 0.0
  %207 = vmatprep.subr.mxu0 0.0
  %208 = vmatpush2.msra.mxu0 0.0
  %209 = vmatprep.subr.mxu0 0.0
  %210 = vmatpush2.msra.mxu0 0.0
  %211 = vmatprep.mubr.f32.mxu0 0.0
  %212 = vmatmul.mubr.f32.gmra.mxu0 %v142
  %v213 = vpop.f32.mrf.mxu0
  %v214 = vadd.f32 %v138, %v213
  %v215 = vpop.f32.mrf.mxu0
  %216 = vmatprep.mubr.f32.mxu0 0.0
  %217 = vmatmul.mubr.f32.gmra.mxu0 %v145
  %v218 = vpop.f32.mrf.mxu0
  %v219 = vadd.f32 %v138, %v218
  %v220 = vpop.f32.mrf.mxu0
  %221 = vdwg.mxu0
  %v222 = vmul.f32 %v214, 0.01
  %v223 = vmul.f32 %v219, 0.01
  %v224 = vmax.f32 %v214, %v222
  %v225 = vmax.f32 %v219, %v223
  %v226 = vld [vmem:[%s5] sm:$0xff]
  %v227 = vld [vmem:[%s5 + $0x8] sm:$0xff]
  %v228 = vld [vmem:[%s5 + $0x10] sm:$0xff]
  %v229 = vld [vmem:[%s5 + $0x18] sm:$0xff]
  %v230 = vld [vmem:[%s6] sm:$0x1]
  %v232 = vlaneseq
  %v233 = vshrl.u32 %v232, 7
  %v234 = vsub.s32 0, %v233
  %v235 = vrot.slane %v230, %v234
  %v238 = vsel %vm140, %v224, 0
  %v241 = vsel %vm140, %v225, 0
  %243 = vmatprep.subr.mxu0 0.0
  %244 = vmatpush1.msra.mxu0 0.0
  %245 = vmatprep.subr.mxu0 0.0
  %246 = vmatpush1.msra.mxu0 0.0
  %247 = vmatprep.subr.mxu0 0.0
  %248 = vmatpush1.msra.mxu0 0.0
  %249 = vmatprep.subr.mxu0 0.0
  %250 = vmatpush1.msra.mxu0 0.0
  %251 = vmatprep.subr.mxu0 0.0
  %252 = vmatpush1.msra.mxu0 0.0
  %253 = vmatprep.subr.mxu0 0.0
  %254 = vmatpush1.msra.mxu0 0.0
  %255 = vmatprep.subr.mxu0 0.0
  %256 = vmatpush1.msra.mxu0 0.0
  %257 = vmatprep.subr.mxu0 0.0
  %258 = vmatpush1.msra.mxu0 0.0
  %259 = vmatprep.subr.mxu0 0.0
  %260 = vmatpush1.msra.mxu0 0.0
  %261 = vmatprep.subr.mxu0 0.0
  %262 = vmatpush1.msra.mxu0 0.0
  %263 = vmatprep.subr.mxu0 0.0
  %264 = vmatpush1.msra.mxu0 0.0
  %265 = vmatprep.subr.mxu0 0.0
  %266 = vmatpush1.msra.mxu0 0.0
  %267 = vmatprep.subr.mxu0 0.0
  %268 = vmatpush1.msra.mxu0 %v229
  %269 = vmatprep.subr.mxu0 0.0
  %270 = vmatpush1.msra.mxu0 %v228
  %271 = vmatprep.subr.mxu0 0.0
  %272 = vmatpush1.msra.mxu0 %v227
  %273 = vmatprep.subr.mxu0 0.0
  %274 = vmatpush1.msra.mxu0 %v226
  %275 = vmatprep.subr.mxu0 0.0
  %276 = vmatpush2.msra.mxu0 0.0
  %277 = vmatprep.subr.mxu0 0.0
  %278 = vmatpush2.msra.mxu0 0.0
  %279 = vmatprep.subr.mxu0 0.0
  %280 = vmatpush2.msra.mxu0 0.0
  %281 = vmatprep.subr.mxu0 0.0
  %282 = vmatpush2.msra.mxu0 0.0
  %283 = vmatprep.subr.mxu0 0.0
  %284 = vmatpush2.msra.mxu0 0.0
  %285 = vmatprep.subr.mxu0 0.0
  %286 = vmatpush2.msra.mxu0 0.0
  %287 = vmatprep.subr.mxu0 0.0
  %288 = vmatpush2.msra.mxu0 0.0
  %289 = vmatprep.subr.mxu0 0.0
  %290 = vmatpush2.msra.mxu0 0.0
  %291 = vmatprep.subr.mxu0 0.0
  %292 = vmatpush2.msra.mxu0 0.0
  %293 = vmatprep.subr.mxu0 0.0
  %294 = vmatpush2.msra.mxu0 0.0
  %295 = vmatprep.subr.mxu0 0.0
  %296 = vmatpush2.msra.mxu0 0.0
  %297 = vmatprep.subr.mxu0 0.0
  %298 = vmatpush2.msra.mxu0 0.0
  %299 = vmatprep.subr.mxu0 0.0
  %300 = vmatpush2.msra.mxu0 0.0
  %301 = vmatprep.subr.mxu0 0.0
  %302 = vmatpush2.msra.mxu0 0.0
  %303 = vmatprep.subr.mxu0 0.0
  %304 = vmatpush2.msra.mxu0 0.0
  %305 = vmatprep.subr.mxu0 0.0
  %306 = vmatpush2.msra.mxu0 0.0
  %307 = vmatprep.mubr.f32.mxu0 0.0
  %308 = vmatmul.mubr.f32.gmra.mxu0 %v238
  %v309 = vpop.f32.mrf.mxu0
  %v310 = vadd.f32 %v235, %v309
  %v311 = vpop.f32.mrf.mxu0
  %312 = vmatprep.mubr.f32.mxu0 0.0
  %313 = vmatmul.mubr.f32.gmra.mxu0 %v241
  %v314 = vpop.f32.mrf.mxu0
  %v315 = vadd.f32 %v235, %v314
  %v316 = vpop.f32.mrf.mxu0
  %317 = vdwg.mxu0
  %v318 = vmul.f32 %v310, 0.01
  %v319 = vmul.f32 %v315, 0.01
  %v320 = vmax.f32 %v310, %v318
  %v321 = vmax.f32 %v315, %v319
  %vm322 = vcmask 130048
  %323 = vst.msk [vmem:[%s7] sm:$0xff] %vm322, %v320
  %324 = vst.msk [vmem:[%s7 + $0x8] sm:$0xff] %vm322, %v321
  // Predicated region
  $region30: #{h_discriminator_forward.1} parent=0 // pred_check
    _
  $region31: #{h_discriminator_forward.1} parent=0 // pred_check_branch
    %326 = sbr.rel (0) target = $region33
  $region32: #{h_discriminator_forward.1} parent=0 // pred_region
    _
  $region33: #{h_discriminator_forward.1} parent=0 // pred_fallthru
    _
  // Predicated region
  $region34: #{h_discriminator_forward.1} parent=0 // pred_check
    _
  $region35: #{h_discriminator_forward.1} parent=0 // pred_check_branch
    %328 = sbr.rel (0) target = $region37
  $region36: #{h_discriminator_forward.1} parent=0 // pred_region
    _
  $region37: #{h_discriminator_forward.1} parent=0 // pred_fallthru
    _

</llo_original>
